<compile_context>
chip_gen: v5e
topology: v5e:2x2
jax: 0.10.0
libtpu: 0.0.40
codegen_flags: <defaults>
</compile_context>

<pallas_src>
import functools

import jax
import jax.numpy as jnp
from jax import lax
from jax.experimental import pallas as pl
from jax.experimental.pallas import tpu as pltpu

LANE = 128


def _channel_attention_kernel(x_ref, w1t_ref, w2t_ref, o_ref,
                              sum_ref, max_ref, pooled_ref,
                              *, inv_hw, tb, n_chunks):
    # x_ref     : (TB, C, tHW)  current batch-tile / spatial-tile of the input
    # w1t_ref   : (C, Ch)       fc1 weight, pre-transposed (Ch = C // 16), resident
    # w2t_ref   : (Ch, C)       fc2 weight, pre-transposed, resident
    # o_ref     : (TB, C)       sigmoid(avg_out + max_out), lane-dense on C
    # sum_ref   : (TB, C, 128)  wide running-sum accumulator (f32)
    # max_ref   : (TB, C, 128)  wide running-max accumulator (f32)
    # pooled_ref: (2*TB, C)     staging buffer for [avg ; max] before the matmuls
    k = pl.program_id(1)
    last = pl.num_programs(1) - 1

    def finalize(s, m):
        # s, m: (TB, C) f32 spatial sum / max.
        pooled_ref[:tb, :] = s * inv_hw                      # avg branch
        pooled_ref[tb:, :] = m                               # max branch
        h = jnp.maximum(
            jnp.dot(pooled_ref[...], w1t_ref[...],
                    preferred_element_type=jnp.float32), 0.0)  # (2*TB, Ch)
        y = jnp.dot(h, w2t_ref[...],
                    preferred_element_type=jnp.float32)        # (2*TB, C)
        o_ref[...] = jax.nn.sigmoid(y[:tb] + y[tb:]).astype(o_ref.dtype)

    if n_chunks > 0:
        # --- Streaming path: elementwise folds into wide accumulators. ---
        @pl.when(k == 0)
        def _():
            sum_ref[...] = jnp.zeros_like(sum_ref)
            max_ref[...] = jnp.full_like(max_ref, -jnp.inf)

        def body(j, carry):
            start = pl.multiple_of(j * LANE, LANE)
            chunk = x_ref[:, :, pl.ds(start, LANE)].astype(jnp.float32)
            sum_ref[...] += chunk                             # VPU add
            max_ref[...] = jnp.maximum(max_ref[...], chunk)   # VPU max
            return carry

        lax.fori_loop(0, n_chunks, body, 0, unroll=(n_chunks <= 16))

        @pl.when(k == last)
        def _():
            # Single cross-lane reduce per batch tile (XLU, off the hot path).
            finalize(jnp.sum(sum_ref[...], axis=-1),
                     jnp.max(max_ref[...], axis=-1))
    else:
        # HW not a multiple of 128: single full-width spatial block per batch
        # tile (grid spatial dim == 1); reduce directly.
        x = x_ref[...].astype(jnp.float32)                    # (TB, C, HW)
        finalize(jnp.sum(x, axis=-1), jnp.max(x, axis=-1))


def _vmem_caps():
    """Generation-gated (vmem_limit_bytes, per-input-block byte cap)."""
    phys = 128 << 20
    try:
        info = pltpu.get_tpu_info()
        phys = int(getattr(info, "vmem_capacity_bytes", phys))
    except Exception:
        pass
    if phys <= (64 << 20):           # v7x-class: 64 MiB physical per TensorCore
        return 44 << 20, 4 << 20
    return 96 << 20, 8 << 20         # v5e / v6e: 128 MiB physical


def _pick_batch_tile(B, C, acc_budget_bytes=4 << 20):
    # Wide accumulators cost 2 * TB * C * 128 * 4 bytes; keep them bounded.
    cap = max(1, acc_budget_bytes // (2 * C * LANE * 4))
    # Candidates: divisors of B that are multiples of 8 (output-block sublane rule).
    cands = [d for d in range(8, min(B, cap) + 1, 8) if B % d == 0]
    # Prefer >= 2 batch blocks so the "parallel" axis can feed 2 TCs (v7x).
    two_block = [d for d in cands if B // d >= 2]
    if two_block:
        return max(two_block)
    if cands:
        return max(cands)
    return B  # block dim equals full array dim -> always legal


def _pick_hw_tile(HW, TB, C, itemsize, block_cap_bytes):
    if HW % LANE != 0:
        return HW, 0  # single full-width block; kernel uses the direct path
    cap_lanes = max(LANE,
                    (block_cap_bytes // (TB * C * itemsize)) // LANE * LANE)
    t = min(HW, cap_lanes)
    while HW % t != 0:
        t -= LANE
    return t, t // LANE


def channel_attention(x, w1, w2):
    """x: (B, C, H, W) NCHW; w1: (C//16, C); w2: (C, C//16). Returns (B, C, 1, 1)."""
    B, C, H, W = x.shape
    Ch = w1.shape[0]
    HW = H * W
    x3 = x.reshape(B, C, HW)
    w1t = jnp.transpose(w1)      # (C, Ch)
    w2t = jnp.transpose(w2)      # (Ch, C)

    vmem_limit, block_cap = _vmem_caps()
    TB = _pick_batch_tile(B, C)
    tHW, n_chunks = _pick_hw_tile(HW, TB, C, x.dtype.itemsize, block_cap)
    grid = (B // TB, HW // tHW)

    kernel = functools.partial(
        _channel_attention_kernel,
        inv_hw=1.0 / float(HW), tb=TB, n_chunks=n_chunks)

    out = pl.pallas_call(
        kernel,
        out_shape=jax.ShapeDtypeStruct((B, C), x.dtype),
        grid_spec=pltpu.PrefetchScalarGridSpec(
            num_scalar_prefetch=0,
            grid=grid,
            in_specs=[
                pl.BlockSpec((TB, C, tHW), lambda b, k: (b, 0, k)),
                pl.BlockSpec((C, Ch), lambda b, k: (0, 0)),   # stays resident
                pl.BlockSpec((Ch, C), lambda b, k: (0, 0)),   # stays resident
            ],
            out_specs=pl.BlockSpec((TB, C), lambda b, k: (b, 0)),
            scratch_shapes=[
                pltpu.VMEM((TB, C, LANE), jnp.float32),   # wide running sum
                pltpu.VMEM((TB, C, LANE), jnp.float32),   # wide running max
                pltpu.VMEM((2 * TB, C), jnp.float32),     # [avg ; max] staging
            ],
        ),
        compiler_params=pltpu.CompilerParams(
            dimension_semantics=("parallel", "arbitrary"),
            vmem_limit_bytes=vmem_limit),
    )(x3, w1t, w2t)
    return out.reshape(B, C, 1, 1)


def channel_attention_ref(x, w1, w2):
    """Pure-JAX reference mirroring the PyTorch module."""
    avg = jnp.mean(x, axis=(2, 3))                          # (B, C)
    mx = jnp.max(x, axis=(2, 3))                            # (B, C)

    def branch(p):
        h = jnp.maximum(p @ w1.T, 0.0)                      # (B, Ch)
        return h @ w2.T                                     # (B, C)

    y = branch(avg) + branch(mx)
    return jax.nn.sigmoid(y)[:, :, None, None]              # (B, C, 1, 1)


if __name__ == "__main__":
    # in_planes must be divisible by 16 (fc1: in_planes -> in_planes // 16).
    B, C, H, W = 2, 64, 16, 16
    Ch = C // 16

    key = jax.random.PRNGKey(0)
    kx, kw1, kw2 = jax.random.split(key, 3)
    x = jax.random.normal(kx, (B, C, H, W), dtype=jnp.float32)
    # Deterministic synthetic weights (conv 1x1 weights squeezed to 2D).
    w1 = jax.random.normal(kw1, (Ch, C), dtype=jnp.float32) * 0.1
    w2 = jax.random.normal(kw2, (C, Ch), dtype=jnp.float32) * 0.1

    out = channel_attention(x, w1, w2)
    out = jax.block_until_ready(out)

    ref = channel_attention_ref(x, w1, w2)
    assert out.shape == (B, C, 1, 1)
    assert jnp.allclose(out, ref, atol=1e-5, rtol=1e-5), "mismatch vs reference"
    print("KERNEL_OK")
</pallas_src>

<mosaic_0001>
module attributes {stable_mosaic.version = 11 : i64} {
  func.func @_channel_attention_kernel(%arg0: i32, %arg1: i32, %arg2: memref<2x64x256xf32, #tpu.memory_space<vmem>>, %arg3: memref<64x4xf32, #tpu.memory_space<vmem>>, %arg4: memref<4x64xf32, #tpu.memory_space<vmem>>, %arg5: memref<2x64xf32, #tpu.memory_space<vmem>>, %arg6: memref<2x64x128xf32, #tpu.memory_space<vmem>>, %arg7: memref<2x64x128xf32, #tpu.memory_space<vmem>>, %arg8: memref<4x64xf32, #tpu.memory_space<vmem>>) attributes {dimension_semantics = [#tpu.dimension_semantics<parallel>, #tpu.dimension_semantics<arbitrary>], iteration_bounds = array<i64: 1, 1>, scalar_prefetch = 0 : i64, scratch_operands = 3 : i64, tpu.core_type = #tpu.core_type<tc>, window_params = [{transform_indices = @transform_0, window_bounds = array<i64: 2, 64, 256>}, {pipeline_mode = #tpu.pipeline_mode<synchronous>, transform_indices = @transform_1, window_bounds = array<i64: 64, 4>}, {pipeline_mode = #tpu.pipeline_mode<synchronous>, transform_indices = @transform_2, window_bounds = array<i64: 4, 64>}, {transform_indices = @transform_3, window_bounds = array<i64: 2, 64>}]} {
    %c0_i32 = arith.constant 0 : i32
    %0 = arith.cmpi eq, %arg1, %c0_i32 : i32
    %1 = arith.extui %0 : i1 to i32
    %c0_i32_0 = arith.constant 0 : i32
    %2 = arith.cmpi ne, %1, %c0_i32_0 : i32
    scf.if %2 {
      %cst = arith.constant 0.000000e+00 : f32
      %26 = vector.broadcast %cst : f32 to vector<2x64x128xf32>
      %c0_32 = arith.constant 0 : index
      %c0_33 = arith.constant 0 : index
      %c0_34 = arith.constant 0 : index
      %27 = vector.load %arg6[%c0_32, %c0_33, %c0_34] : memref<2x64x128xf32, #tpu.memory_space<vmem>>, vector<2x64x128xf32>
      tpu.vector_store %arg6[%c0_32, %c0_33, %c0_34], %26 {strides = array<i32>} : memref<2x64x128xf32, #tpu.memory_space<vmem>>, vector<2x64x128xf32>,
      %cst_35 = arith.constant 0xFF800000 : f32
      %28 = vector.broadcast %cst_35 : f32 to vector<2x64x128xf32>
      %c0_36 = arith.constant 0 : index
      %c0_37 = arith.constant 0 : index
      %c0_38 = arith.constant 0 : index
      %29 = vector.load %arg7[%c0_36, %c0_37, %c0_38] : memref<2x64x128xf32, #tpu.memory_space<vmem>>, vector<2x64x128xf32>
      tpu.vector_store %arg7[%c0_36, %c0_37, %c0_38], %28 {strides = array<i32>} : memref<2x64x128xf32, #tpu.memory_space<vmem>>, vector<2x64x128xf32>,
    } else {
    }
    %c0_i32_1 = arith.constant 0 : i32
    %c128_i32 = arith.constant 128 : i32
    %3 = arith.muli %c0_i32_1, %c128_i32 : i32
    %4 = tpu.assume_multiple %3, 128 : i32
    %c0 = arith.constant 0 : index
    %c0_2 = arith.constant 0 : index
    %5 = arith.index_cast %4 : i32 to index
    %6 = vector.load %arg2[%c0, %c0_2, %5] : memref<2x64x256xf32, #tpu.memory_space<vmem>>, vector<2x64x128xf32>
    %c0_3 = arith.constant 0 : index
    %c0_4 = arith.constant 0 : index
    %c0_5 = arith.constant 0 : index
    %7 = vector.load %arg6[%c0_3, %c0_4, %c0_5] : memref<2x64x128xf32, #tpu.memory_space<vmem>>, vector<2x64x128xf32>
    %8 = arith.addf %7, %6 : vector<2x64x128xf32>
    %c0_6 = arith.constant 0 : index
    %c0_7 = arith.constant 0 : index
    %c0_8 = arith.constant 0 : index
    %9 = vector.load %arg6[%c0_6, %c0_7, %c0_8] : memref<2x64x128xf32, #tpu.memory_space<vmem>>, vector<2x64x128xf32>
    tpu.vector_store %arg6[%c0_6, %c0_7, %c0_8], %8 {strides = array<i32>} : memref<2x64x128xf32, #tpu.memory_space<vmem>>, vector<2x64x128xf32>,
    %c0_9 = arith.constant 0 : index
    %c0_10 = arith.constant 0 : index
    %c0_11 = arith.constant 0 : index
    %10 = vector.load %arg7[%c0_9, %c0_10, %c0_11] : memref<2x64x128xf32, #tpu.memory_space<vmem>>, vector<2x64x128xf32>
    %11 = arith.maximumf %10, %6 : vector<2x64x128xf32>
    %c0_12 = arith.constant 0 : index
    %c0_13 = arith.constant 0 : index
    %c0_14 = arith.constant 0 : index
    %12 = vector.load %arg7[%c0_12, %c0_13, %c0_14] : memref<2x64x128xf32, #tpu.memory_space<vmem>>, vector<2x64x128xf32>
    tpu.vector_store %arg7[%c0_12, %c0_13, %c0_14], %11 {strides = array<i32>} : memref<2x64x128xf32, #tpu.memory_space<vmem>>, vector<2x64x128xf32>,
    %c1_i32 = arith.constant 1 : i32
    %c128_i32_15 = arith.constant 128 : i32
    %13 = arith.muli %c1_i32, %c128_i32_15 : i32
    %14 = tpu.assume_multiple %13, 128 : i32
    %c0_16 = arith.constant 0 : index
    %c0_17 = arith.constant 0 : index
    %15 = arith.index_cast %14 : i32 to index
    %16 = vector.load %arg2[%c0_16, %c0_17, %15] : memref<2x64x256xf32, #tpu.memory_space<vmem>>, vector<2x64x128xf32>
    %c0_18 = arith.constant 0 : index
    %c0_19 = arith.constant 0 : index
    %c0_20 = arith.constant 0 : index
    %17 = vector.load %arg6[%c0_18, %c0_19, %c0_20] : memref<2x64x128xf32, #tpu.memory_space<vmem>>, vector<2x64x128xf32>
    %18 = arith.addf %17, %16 : vector<2x64x128xf32>
    %c0_21 = arith.constant 0 : index
    %c0_22 = arith.constant 0 : index
    %c0_23 = arith.constant 0 : index
    %19 = vector.load %arg6[%c0_21, %c0_22, %c0_23] : memref<2x64x128xf32, #tpu.memory_space<vmem>>, vector<2x64x128xf32>
    tpu.vector_store %arg6[%c0_21, %c0_22, %c0_23], %18 {strides = array<i32>} : memref<2x64x128xf32, #tpu.memory_space<vmem>>, vector<2x64x128xf32>,
    %c0_24 = arith.constant 0 : index
    %c0_25 = arith.constant 0 : index
    %c0_26 = arith.constant 0 : index
    %20 = vector.load %arg7[%c0_24, %c0_25, %c0_26] : memref<2x64x128xf32, #tpu.memory_space<vmem>>, vector<2x64x128xf32>
    %21 = arith.maximumf %20, %16 : vector<2x64x128xf32>
    %c0_27 = arith.constant 0 : index
    %c0_28 = arith.constant 0 : index
    %c0_29 = arith.constant 0 : index
    %22 = vector.load %arg7[%c0_27, %c0_28, %c0_29] : memref<2x64x128xf32, #tpu.memory_space<vmem>>, vector<2x64x128xf32>
    tpu.vector_store %arg7[%c0_27, %c0_28, %c0_29], %21 {strides = array<i32>} : memref<2x64x128xf32, #tpu.memory_space<vmem>>, vector<2x64x128xf32>,
    %c2_i32 = arith.constant 2 : i32
    %c0_i32_30 = arith.constant 0 : i32
    %23 = arith.cmpi eq, %arg1, %c0_i32_30 : i32
    %24 = arith.extui %23 : i1 to i32
    %c0_i32_31 = arith.constant 0 : i32
    %25 = arith.cmpi ne, %24, %c0_i32_31 : i32
    scf.if %25 {
      %c0_32 = arith.constant 0 : index
      %c0_33 = arith.constant 0 : index
      %c0_34 = arith.constant 0 : index
      %26 = vector.load %arg6[%c0_32, %c0_33, %c0_34] : memref<2x64x128xf32, #tpu.memory_space<vmem>>, vector<2x64x128xf32>
      %cst = arith.constant dense<0.000000e+00> : vector<2x64xf32>
      %27 = vector.multi_reduction <add>, %26, %cst [2] : vector<2x64x128xf32> to vector<2x64xf32>
      %c0_35 = arith.constant 0 : index
      %c0_36 = arith.constant 0 : index
      %c0_37 = arith.constant 0 : index
      %28 = vector.load %arg7[%c0_35, %c0_36, %c0_37] : memref<2x64x128xf32, #tpu.memory_space<vmem>>, vector<2x64x128xf32>
      %cst_38 = arith.constant dense<0xFF800000> : vector<2x64xf32>
      %29 = vector.multi_reduction <maximumf>, %28, %cst_38 [2] : vector<2x64x128xf32> to vector<2x64xf32>
      %cst_39 = arith.constant 3.906250e-03 : f32
      %30 = vector.broadcast %cst_39 : f32 to vector<2x64xf32>
      %31 = arith.mulf %27, %30 : vector<2x64xf32>
      %c0_40 = arith.constant 0 : index
      %c0_41 = arith.constant 0 : index
      %32 = vector.load %arg8[%c0_40, %c0_41] : memref<4x64xf32, #tpu.memory_space<vmem>>, vector<2x64xf32>
      tpu.vector_store %arg8[%c0_40, %c0_41], %31 {strides = array<i32>} : memref<4x64xf32, #tpu.memory_space<vmem>>, vector<2x64xf32>,
      %c2 = arith.constant 2 : index
      %c0_42 = arith.constant 0 : index
      %33 = vector.load %arg8[%c2, %c0_42] : memref<4x64xf32, #tpu.memory_space<vmem>>, vector<2x64xf32>
      tpu.vector_store %arg8[%c2, %c0_42], %29 {strides = array<i32>} : memref<4x64xf32, #tpu.memory_space<vmem>>, vector<2x64xf32>,
      %c0_43 = arith.constant 0 : index
      %c0_44 = arith.constant 0 : index
      %34 = vector.load %arg8[%c0_43, %c0_44] : memref<4x64xf32, #tpu.memory_space<vmem>>, vector<4x64xf32>
      %c0_45 = arith.constant 0 : index
      %c0_46 = arith.constant 0 : index
      %35 = vector.load %arg3[%c0_45, %c0_46] : memref<64x4xf32, #tpu.memory_space<vmem>>, vector<64x4xf32>
      %cst_47 = arith.constant dense<0.000000e+00> : vector<4x4xf32>
      %36 = tpu.matmul %34, %35, %cst_47 {dimension_numbers = #tpu.dot_dimension_numbers<[1], [0], [0], [1], [0, 0, 1, 1], [], []>} : vector<4x64xf32>, vector<64x4xf32>, vector<4x4xf32> -> vector<4x4xf32>
      %cst_48 = arith.constant 0.000000e+00 : f32
      %37 = vector.broadcast %cst_48 : f32 to vector<4x4xf32>
      %38 = arith.maximumf %36, %37 : vector<4x4xf32>
      %c0_49 = arith.constant 0 : index
      %c0_50 = arith.constant 0 : index
      %39 = vector.load %arg4[%c0_49, %c0_50] : memref<4x64xf32, #tpu.memory_space<vmem>>, vector<4x64xf32>
      %cst_51 = arith.constant dense<0.000000e+00> : vector<4x64xf32>
      %40 = tpu.matmul %38, %39, %cst_51 {dimension_numbers = #tpu.dot_dimension_numbers<[1], [0], [0], [1], [0, 0, 1, 1], [], []>} : vector<4x4xf32>, vector<4x64xf32>, vector<4x64xf32> -> vector<4x64xf32>
      %41 = vector.extract_strided_slice %40 {offsets = [0, 0], sizes = [2, 64], strides = [1, 1]} : vector<4x64xf32> to vector<2x64xf32>
      %42 = vector.extract_strided_slice %40 {offsets = [2, 0], sizes = [2, 64], strides = [1, 1]} : vector<4x64xf32> to vector<2x64xf32>
      %43 = arith.addf %41, %42 : vector<2x64xf32>
      %44 = arith.negf %43 : vector<2x64xf32>
      %45 = math.exp %44 : vector<2x64xf32>
      %cst_52 = arith.constant 1.000000e+00 : f32
      %46 = vector.broadcast %cst_52 : f32 to vector<2x64xf32>
      %47 = arith.addf %46, %45 : vector<2x64xf32>
      %48 = arith.divf %46, %47 : vector<2x64xf32>
      %c0_53 = arith.constant 0 : index
      %c0_54 = arith.constant 0 : index
      %49 = vector.load %arg5[%c0_53, %c0_54] : memref<2x64xf32, #tpu.memory_space<vmem>>, vector<2x64xf32>
      tpu.vector_store %arg5[%c0_53, %c0_54], %48 {strides = array<i32>} : memref<2x64xf32, #tpu.memory_space<vmem>>, vector<2x64xf32>,
    } else {
    }
    return
  }
  func.func @transform_0(%arg0: i32, %arg1: i32) -> (i32, i32, i32) {
    %c0_i32 = arith.constant 0 : i32
    %c0_i32_0 = arith.constant 0 : i32
    return %arg0, %c0_i32, %arg1 : i32, i32, i32
  }
  func.func @transform_1(%arg0: i32, %arg1: i32) -> (i32, i32) {
    %c0_i32 = arith.constant 0 : i32
    %c0_i32_0 = arith.constant 0 : i32
    %c0_i32_1 = arith.constant 0 : i32
    return %c0_i32, %c0_i32_0 : i32, i32
  }
  func.func @transform_2(%arg0: i32, %arg1: i32) -> (i32, i32) {
    %c0_i32 = arith.constant 0 : i32
    %c0_i32_0 = arith.constant 0 : i32
    %c0_i32_1 = arith.constant 0 : i32
    return %c0_i32, %c0_i32_0 : i32, i32
  }
  func.func @transform_3(%arg0: i32, %arg1: i32) -> (i32, i32) {
    %c0_i32 = arith.constant 0 : i32
    %c0_i32_0 = arith.constant 0 : i32
    return %arg0, %c0_i32 : i32, i32
  }
}

</mosaic_0001>

<llo_original>
// kernel: tpu_custom_call.1
$region0: #{tpu_custom_call.1}
  #allocation0 [shape = 'u32[]', space=smem, size = 0x4, offset = 0x4, fixed_abs, tag = 'smem constant byte address 0x4 - core index']
  #allocation1 [shape = 'u32[72,128]{1,0:T(1,128)}', space=vmem, size = 0x9000, scoped, tag = 'internal scratch']
  #allocation2 [shape = 'f32[2,64,128]{2,1,0:T(8,128)}', space=vmem, size = 0x10000, scoped, tag = 'scratch operand']
  #allocation3 [shape = 'f32[2,64,128]{2,1,0:T(8,128)}', space=vmem, size = 0x10000, scoped, tag = 'scratch operand']
  #allocation4 [shape = 'f32[4,64]{1,0:T(4,128)}', space=vmem, size = 0x800, scoped, tag = 'scratch operand']
  %s0 = inlined_call_operand.hbm [shape: f32[2,64,256], index: 0, kind: input, shape index: {}]
  %s1 = inlined_call_operand.vmem [shape: f32[64,4], index: 1, kind: input, shape index: {}]
  %s2 = inlined_call_operand.vmem [shape: f32[4,64], index: 2, kind: input, shape index: {}]
  %s3 = inlined_call_operand.hbm [shape: f32[2,64], index: 3, kind: output, shape index: {}]
  %s4 = sld [smem:[#allocation0]]
  $region34: #{tpu_custom_call.1} parent=0
    _
  %s6 = ssub.s32 1, %s4
  %s7 = scalar_select 0, %s6, %s4
  $region1: #{tpu_custom_call.1} parent=0
    #allocation5 [shape = 'u8[131072]{0}', space=vmem, size = 0x20000, scoped, tag = 'input window, operand 0, single buffered']
    #allocation6 [shape = 's32[1]{0}', space=sflag, size = 0x4, scoped, tag = 'scoped memory for tpu_custom_call.1']
    #allocation7 [shape = 's32[1]{0}', space=sflag, size = 0x4, scoped, tag = 'scoped memory for tpu_custom_call.1']
    #allocation8 [shape = 'u8[1024]{0}', space=vmem, size = 0x400, scoped, tag = 'output window, operand 0, single buffered']
    %8 = vsyncpa [#allocation6], 0
    %9 = vsyncpa [#allocation7], 0
    // Predicated region
    $region2: #{tpu_custom_call.1} parent=1 // pred_check
      _
    $region3: #{tpu_custom_call.1} parent=1 // pred_check_branch
      %11 = sbr.rel (0) target = $region5
    $region4: #{tpu_custom_call.1} parent=1 // pred_region
      %13 = vsyncadd [#allocation6], 0
      %s14 = sshll.u32 %s0, 4
      %s15 = int_to_ptr.hbm [resolvable:$true] %s14
      %s16 = sshll.u32 [#allocation5], 4
      %s17 = int_to_ptr.vmem [resolvable:$true] %s16
      %22 = dma.hbm_to_vmem [thread:$0]  %s15, 4096, %s17, [#allocation6], 256, 256, 16
    $region5: #{tpu_custom_call.1} parent=1 // pred_fallthru
      _
    // Predicated region
    $region6: #{tpu_custom_call.1} parent=1 // pred_check
      _
    $region7: #{tpu_custom_call.1} parent=1 // pred_check_branch
      %24 = sbr.rel (0) target = $region9
    $region8: #{tpu_custom_call.1} parent=1 // pred_region
      _
    $region9: #{tpu_custom_call.1} parent=1 // pred_fallthru
      _
    // Predicated region
    $region10: #{tpu_custom_call.1} parent=1 // pred_check
      _
    $region11: #{tpu_custom_call.1} parent=1 // pred_check_branch
      %26 = sbr.rel (0) target = $region13
    $region12: #{tpu_custom_call.1} parent=1 // pred_region
      _
    $region13: #{tpu_custom_call.1} parent=1 // pred_fallthru
      _
    // Predicated region
    $region14: #{tpu_custom_call.1} parent=1 // pred_check
      _
    $region15: #{tpu_custom_call.1} parent=1 // pred_check_branch
      %28 = sbr.rel (0) target = $region17
    $region16: #{tpu_custom_call.1} parent=1 // pred_region
      %30 = dma.done [#allocation6], 4096
    $region17: #{tpu_custom_call.1} parent=1 // pred_fallthru
      _
    %p31 = scmp.eq.s32.totalorder 0, 0
    // Predicated region
    $region18: #{tpu_custom_call.1} parent=1 // pred_check
      %p32 = pneg %p31
    $region19: #{tpu_custom_call.1} parent=1 // pred_check_branch
      %34 = sbr.rel (%p32) target = $region21
    $region20: #{tpu_custom_call.1} parent=1 // pred_region
      %35 = vst [vmem:[#allocation2] sm:$0xff] 0.0
      %36 = vst [vmem:[#allocation2 + $0x8] sm:$0xff] 0.0
      %37 = vst [vmem:[#allocation2 + $0x10] sm:$0xff] 0.0
      %38 = vst [vmem:[#allocation2 + $0x18] sm:$0xff] 0.0
      %39 = vst [vmem:[#allocation2 + $0x20] sm:$0xff] 0.0
      %40 = vst [vmem:[#allocation2 + $0x28] sm:$0xff] 0.0
      %41 = vst [vmem:[#allocation2 + $0x30] sm:$0xff] 0.0
      %42 = vst [vmem:[#allocation2 + $0x38] sm:$0xff] 0.0
      %43 = vst [vmem:[#allocation2 + $0x40] sm:$0xff] 0.0
      %44 = vst [vmem:[#allocation2 + $0x48] sm:$0xff] 0.0
      %45 = vst [vmem:[#allocation2 + $0x50] sm:$0xff] 0.0
      %46 = vst [vmem:[#allocation2 + $0x58] sm:$0xff] 0.0
      %47 = vst [vmem:[#allocation2 + $0x60] sm:$0xff] 0.0
      %48 = vst [vmem:[#allocation2 + $0x68] sm:$0xff] 0.0
      %49 = vst [vmem:[#allocation2 + $0x70] sm:$0xff] 0.0
      %50 = vst [vmem:[#allocation2 + $0x78] sm:$0xff] 0.0
      %51 = vst [vmem:[#allocation3] sm:$0xff] -inf
      %52 = vst [vmem:[#allocation3 + $0x8] sm:$0xff] -inf
      %53 = vst [vmem:[#allocation3 + $0x10] sm:$0xff] -inf
      %54 = vst [vmem:[#allocation3 + $0x18] sm:$0xff] -inf
      %55 = vst [vmem:[#allocation3 + $0x20] sm:$0xff] -inf
      %56 = vst [vmem:[#allocation3 + $0x28] sm:$0xff] -inf
      %57 = vst [vmem:[#allocation3 + $0x30] sm:$0xff] -inf
      %58 = vst [vmem:[#allocation3 + $0x38] sm:$0xff] -inf
      %59 = vst [vmem:[#allocation3 + $0x40] sm:$0xff] -inf
      %60 = vst [vmem:[#allocation3 + $0x48] sm:$0xff] -inf
      %61 = vst [vmem:[#allocation3 + $0x50] sm:$0xff] -inf
      %62 = vst [vmem:[#allocation3 + $0x58] sm:$0xff] -inf
      %63 = vst [vmem:[#allocation3 + $0x60] sm:$0xff] -inf
      %64 = vst [vmem:[#allocation3 + $0x68] sm:$0xff] -inf
      %65 = vst [vmem:[#allocation3 + $0x70] sm:$0xff] -inf
      %66 = vst [vmem:[#allocation3 + $0x78] sm:$0xff] -inf
    $region21: #{tpu_custom_call.1} parent=1 // pred_fallthru
      _
    %v67 = vld [vmem:[#allocation5] sm:$0xff]
    %v68 = vld [vmem:[#allocation5 + $0x10] sm:$0xff]
    %v69 = vld [vmem:[#allocation5 + $0x20] sm:$0xff]
    %v70 = vld [vmem:[#allocation5 + $0x30] sm:$0xff]
    %v71 = vld [vmem:[#allocation5 + $0x40] sm:$0xff]
    %v72 = vld [vmem:[#allocation5 + $0x50] sm:$0xff]
    %v73 = vld [vmem:[#allocation5 + $0x60] sm:$0xff]
    %v74 = vld [vmem:[#allocation5 + $0x70] sm:$0xff]
    %v75 = vld [vmem:[#allocation5 + $0x80] sm:$0xff]
    %v76 = vld [vmem:[#allocation5 + $0x90] sm:$0xff]
    %v77 = vld [vmem:[#allocation5 + $0xa0] sm:$0xff]
    %v78 = vld [vmem:[#allocation5 + $0xb0] sm:$0xff]
    %v79 = vld [vmem:[#allocation5 + $0xc0] sm:$0xff]
    %v80 = vld [vmem:[#allocation5 + $0xd0] sm:$0xff]
    %v81 = vld [vmem:[#allocation5 + $0xe0] sm:$0xff]
    %v82 = vld [vmem:[#allocation5 + $0xf0] sm:$0xff]
    %v83 = vld [vmem:[#allocation2] sm:$0xff]
    %v84 = vld [vmem:[#allocation2 + $0x8] sm:$0xff]
    %v85 = vld [vmem:[#allocation2 + $0x10] sm:$0xff]
    %v86 = vld [vmem:[#allocation2 + $0x18] sm:$0xff]
    %v87 = vld [vmem:[#allocation2 + $0x20] sm:$0xff]
    %v88 = vld [vmem:[#allocation2 + $0x28] sm:$0xff]
    %v89 = vld [vmem:[#allocation2 + $0x30] sm:$0xff]
    %v90 = vld [vmem:[#allocation2 + $0x38] sm:$0xff]
    %v91 = vld [vmem:[#allocation2 + $0x40] sm:$0xff]
    %v92 = vld [vmem:[#allocation2 + $0x48] sm:$0xff]
    %v93 = vld [vmem:[#allocation2 + $0x50] sm:$0xff]
    %v94 = vld [vmem:[#allocation2 + $0x58] sm:$0xff]
    %v95 = vld [vmem:[#allocation2 + $0x60] sm:$0xff]
    %v96 = vld [vmem:[#allocation2 + $0x68] sm:$0xff]
    %v97 = vld [vmem:[#allocation2 + $0x70] sm:$0xff]
    %v98 = vld [vmem:[#allocation2 + $0x78] sm:$0xff]
    %v99 = vadd.f32 %v83, %v67
    %v100 = vadd.f32 %v84, %v68
    %v101 = vadd.f32 %v85, %v69
    %v102 = vadd.f32 %v86, %v70
    %v103 = vadd.f32 %v87, %v71
    %v104 = vadd.f32 %v88, %v72
    %v105 = vadd.f32 %v89, %v73
    %v106 = vadd.f32 %v90, %v74
    %v107 = vadd.f32 %v91, %v75
    %v108 = vadd.f32 %v92, %v76
    %v109 = vadd.f32 %v93, %v77
    %v110 = vadd.f32 %v94, %v78
    %v111 = vadd.f32 %v95, %v79
    %v112 = vadd.f32 %v96, %v80
    %v113 = vadd.f32 %v97, %v81
    %v114 = vadd.f32 %v98, %v82
    %115 = vst [vmem:[#allocation2] sm:$0xff] %v99
    %116 = vst [vmem:[#allocation2 + $0x8] sm:$0xff] %v100
    %117 = vst [vmem:[#allocation2 + $0x10] sm:$0xff] %v101
    %118 = vst [vmem:[#allocation2 + $0x18] sm:$0xff] %v102
    %119 = vst [vmem:[#allocation2 + $0x20] sm:$0xff] %v103
    %120 = vst [vmem:[#allocation2 + $0x28] sm:$0xff] %v104
    %121 = vst [vmem:[#allocation2 + $0x30] sm:$0xff] %v105
    %122 = vst [vmem:[#allocation2 + $0x38] sm:$0xff] %v106
    %123 = vst [vmem:[#allocation2 + $0x40] sm:$0xff] %v107
    %124 = vst [vmem:[#allocation2 + $0x48] sm:$0xff] %v108
    %125 = vst [vmem:[#allocation2 + $0x50] sm:$0xff] %v109
    %126 = vst [vmem:[#allocation2 + $0x58] sm:$0xff] %v110
    %127 = vst [vmem:[#allocation2 + $0x60] sm:$0xff] %v111
    %128 = vst [vmem:[#allocation2 + $0x68] sm:$0xff] %v112
    %129 = vst [vmem:[#allocation2 + $0x70] sm:$0xff] %v113
    %130 = vst [vmem:[#allocation2 + $0x78] sm:$0xff] %v114
    %v131 = vld [vmem:[#allocation3] sm:$0xff]
    %v132 = vld [vmem:[#allocation3 + $0x8] sm:$0xff]
    %v133 = vld [vmem:[#allocation3 + $0x10] sm:$0xff]
    %v134 = vld [vmem:[#allocation3 + $0x18] sm:$0xff]
    %v135 = vld [vmem:[#allocation3 + $0x20] sm:$0xff]
    %v136 = vld [vmem:[#allocation3 + $0x28] sm:$0xff]
    %v137 = vld [vmem:[#allocation3 + $0x30] sm:$0xff]
    %v138 = vld [vmem:[#allocation3 + $0x38] sm:$0xff]
    %v139 = vld [vmem:[#allocation3 + $0x40] sm:$0xff]
    %v140 = vld [vmem:[#allocation3 + $0x48] sm:$0xff]
    %v141 = vld [vmem:[#allocation3 + $0x50] sm:$0xff]
    %v142 = vld [vmem:[#allocation3 + $0x58] sm:$0xff]
    %v143 = vld [vmem:[#allocation3 + $0x60] sm:$0xff]
    %v144 = vld [vmem:[#allocation3 + $0x68] sm:$0xff]
    %v145 = vld [vmem:[#allocation3 + $0x70] sm:$0xff]
    %v146 = vld [vmem:[#allocation3 + $0x78] sm:$0xff]
    %v147 = vmax.f32 %v131, %v67
    %v148 = vmax.f32 %v132, %v68
    %v149 = vmax.f32 %v133, %v69
    %v150 = vmax.f32 %v134, %v70
    %v151 = vmax.f32 %v135, %v71
    %v152 = vmax.f32 %v136, %v72
    %v153 = vmax.f32 %v137, %v73
    %v154 = vmax.f32 %v138, %v74
    %v155 = vmax.f32 %v139, %v75
    %v156 = vmax.f32 %v140, %v76
    %v157 = vmax.f32 %v141, %v77
    %v158 = vmax.f32 %v142, %v78
    %v159 = vmax.f32 %v143, %v79
    %v160 = vmax.f32 %v144, %v80
    %v161 = vmax.f32 %v145, %v81
    %v162 = vmax.f32 %v146, %v82
    %163 = vst [vmem:[#allocation3] sm:$0xff] %v147
    %164 = vst [vmem:[#allocation3 + $0x8] sm:$0xff] %v148
    %165 = vst [vmem:[#allocation3 + $0x10] sm:$0xff] %v149
    %166 = vst [vmem:[#allocation3 + $0x18] sm:$0xff] %v150
    %167 = vst [vmem:[#allocation3 + $0x20] sm:$0xff] %v151
    %168 = vst [vmem:[#allocation3 + $0x28] sm:$0xff] %v152
    %169 = vst [vmem:[#allocation3 + $0x30] sm:$0xff] %v153
    %170 = vst [vmem:[#allocation3 + $0x38] sm:$0xff] %v154
    %171 = vst [vmem:[#allocation3 + $0x40] sm:$0xff] %v155
    %172 = vst [vmem:[#allocation3 + $0x48] sm:$0xff] %v156
    %173 = vst [vmem:[#allocation3 + $0x50] sm:$0xff] %v157
    %174 = vst [vmem:[#allocation3 + $0x58] sm:$0xff] %v158
    %175 = vst [vmem:[#allocation3 + $0x60] sm:$0xff] %v159
    %176 = vst [vmem:[#allocation3 + $0x68] sm:$0xff] %v160
    %177 = vst [vmem:[#allocation3 + $0x70] sm:$0xff] %v161
    %178 = vst [vmem:[#allocation3 + $0x78] sm:$0xff] %v162
    %s179 = scalar_lea.vmem [#allocation5], 8
    %v180 = vld [vmem:[%s179] sm:$0xff]
    %v181 = vld [vmem:[%s179 + $0x10] sm:$0xff]
    %v182 = vld [vmem:[%s179 + $0x20] sm:$0xff]
    %v183 = vld [vmem:[%s179 + $0x30] sm:$0xff]
    %v184 = vld [vmem:[%s179 + $0x40] sm:$0xff]
    %v185 = vld [vmem:[%s179 + $0x50] sm:$0xff]
    %v186 = vld [vmem:[%s179 + $0x60] sm:$0xff]
    %v187 = vld [vmem:[%s179 + $0x70] sm:$0xff]
    %v188 = vld [vmem:[%s179 + $0x80] sm:$0xff]
    %v189 = vld [vmem:[%s179 + $0x90] sm:$0xff]
    %v190 = vld [vmem:[%s179 + $0xa0] sm:$0xff]
    %v191 = vld [vmem:[%s179 + $0xb0] sm:$0xff]
    %v192 = vld [vmem:[%s179 + $0xc0] sm:$0xff]
    %v193 = vld [vmem:[%s179 + $0xd0] sm:$0xff]
    %v194 = vld [vmem:[%s179 + $0xe0] sm:$0xff]
    %v195 = vld [vmem:[%s179 + $0xf0] sm:$0xff]
    %v196 = vld [vmem:[#allocation2] sm:$0xff]
    %v197 = vld [vmem:[#allocation2 + $0x8] sm:$0xff]
    %v198 = vld [vmem:[#allocation2 + $0x10] sm:$0xff]
    %v199 = vld [vmem:[#allocation2 + $0x18] sm:$0xff]
    %v200 = vld [vmem:[#allocation2 + $0x20] sm:$0xff]
    %v201 = vld [vmem:[#allocation2 + $0x28] sm:$0xff]
    %v202 = vld [vmem:[#allocation2 + $0x30] sm:$0xff]
    %v203 = vld [vmem:[#allocation2 + $0x38] sm:$0xff]
    %v204 = vld [vmem:[#allocation2 + $0x40] sm:$0xff]
    %v205 = vld [vmem:[#allocation2 + $0x48] sm:$0xff]
    %v206 = vld [vmem:[#allocation2 + $0x50] sm:$0xff]
    %v207 = vld [vmem:[#allocation2 + $0x58] sm:$0xff]
    %v208 = vld [vmem:[#allocation2 + $0x60] sm:$0xff]
    %v209 = vld [vmem:[#allocation2 + $0x68] sm:$0xff]
    %v210 = vld [vmem:[#allocation2 + $0x70] sm:$0xff]
    %v211 = vld [vmem:[#allocation2 + $0x78] sm:$0xff]
    %v212 = vadd.f32 %v196, %v180
    %v213 = vadd.f32 %v197, %v181
    %v214 = vadd.f32 %v198, %v182
    %v215 = vadd.f32 %v199, %v183
    %v216 = vadd.f32 %v200, %v184
    %v217 = vadd.f32 %v201, %v185
    %v218 = vadd.f32 %v202, %v186
    %v219 = vadd.f32 %v203, %v187
    %v220 = vadd.f32 %v204, %v188
    %v221 = vadd.f32 %v205, %v189
    %v222 = vadd.f32 %v206, %v190
    %v223 = vadd.f32 %v207, %v191
    %v224 = vadd.f32 %v208, %v192
    %v225 = vadd.f32 %v209, %v193
    %v226 = vadd.f32 %v210, %v194
    %v227 = vadd.f32 %v211, %v195
    %228 = vst [vmem:[#allocation2] sm:$0xff] %v212
    %229 = vst [vmem:[#allocation2 + $0x8] sm:$0xff] %v213
    %230 = vst [vmem:[#allocation2 + $0x10] sm:$0xff] %v214
    %231 = vst [vmem:[#allocation2 + $0x18] sm:$0xff] %v215
    %232 = vst [vmem:[#allocation2 + $0x20] sm:$0xff] %v216
    %233 = vst [vmem:[#allocation2 + $0x28] sm:$0xff] %v217
    %234 = vst [vmem:[#allocation2 + $0x30] sm:$0xff] %v218
    %235 = vst [vmem:[#allocation2 + $0x38] sm:$0xff] %v219
    %236 = vst [vmem:[#allocation2 + $0x40] sm:$0xff] %v220
    %237 = vst [vmem:[#allocation2 + $0x48] sm:$0xff] %v221
    %238 = vst [vmem:[#allocation2 + $0x50] sm:$0xff] %v222
    %239 = vst [vmem:[#allocation2 + $0x58] sm:$0xff] %v223
    %240 = vst [vmem:[#allocation2 + $0x60] sm:$0xff] %v224
    %241 = vst [vmem:[#allocation2 + $0x68] sm:$0xff] %v225
    %242 = vst [vmem:[#allocation2 + $0x70] sm:$0xff] %v226
    %243 = vst [vmem:[#allocation2 + $0x78] sm:$0xff] %v227
    %v244 = vld [vmem:[#allocation3] sm:$0xff]
    %v245 = vld [vmem:[#allocation3 + $0x8] sm:$0xff]
    %v246 = vld [vmem:[#allocation3 + $0x10] sm:$0xff]
    %v247 = vld [vmem:[#allocation3 + $0x18] sm:$0xff]
    %v248 = vld [vmem:[#allocation3 + $0x20] sm:$0xff]
    %v249 = vld [vmem:[#allocation3 + $0x28] sm:$0xff]
    %v250 = vld [vmem:[#allocation3 + $0x30] sm:$0xff]
    %v251 = vld [vmem:[#allocation3 + $0x38] sm:$0xff]
    %v252 = vld [vmem:[#allocation3 + $0x40] sm:$0xff]
    %v253 = vld [vmem:[#allocation3 + $0x48] sm:$0xff]
    %v254 = vld [vmem:[#allocation3 + $0x50] sm:$0xff]
    %v255 = vld [vmem:[#allocation3 + $0x58] sm:$0xff]
    %v256 = vld [vmem:[#allocation3 + $0x60] sm:$0xff]
    %v257 = vld [vmem:[#allocation3 + $0x68] sm:$0xff]
    %v258 = vld [vmem:[#allocation3 + $0x70] sm:$0xff]
    %v259 = vld [vmem:[#allocation3 + $0x78] sm:$0xff]
    %v260 = vmax.f32 %v244, %v180
    %v261 = vmax.f32 %v245, %v181
    %v262 = vmax.f32 %v246, %v182
    %v263 = vmax.f32 %v247, %v183
    %v264 = vmax.f32 %v248, %v184
    %v265 = vmax.f32 %v249, %v185
    %v266 = vmax.f32 %v250, %v186
    %v267 = vmax.f32 %v251, %v187
    %v268 = vmax.f32 %v252, %v188
    %v269 = vmax.f32 %v253, %v189
    %v270 = vmax.f32 %v254, %v190
    %v271 = vmax.f32 %v255, %v191
    %v272 = vmax.f32 %v256, %v192
    %v273 = vmax.f32 %v257, %v193
    %v274 = vmax.f32 %v258, %v194
    %v275 = vmax.f32 %v259, %v195
    %276 = vst [vmem:[#allocation3] sm:$0xff] %v260
    %277 = vst [vmem:[#allocation3 + $0x8] sm:$0xff] %v261
    %278 = vst [vmem:[#allocation3 + $0x10] sm:$0xff] %v262
    %279 = vst [vmem:[#allocation3 + $0x18] sm:$0xff] %v263
    %280 = vst [vmem:[#allocation3 + $0x20] sm:$0xff] %v264
    %281 = vst [vmem:[#allocation3 + $0x28] sm:$0xff] %v265
    %282 = vst [vmem:[#allocation3 + $0x30] sm:$0xff] %v266
    %283 = vst [vmem:[#allocation3 + $0x38] sm:$0xff] %v267
    %284 = vst [vmem:[#allocation3 + $0x40] sm:$0xff] %v268
    %285 = vst [vmem:[#allocation3 + $0x48] sm:$0xff] %v269
    %286 = vst [vmem:[#allocation3 + $0x50] sm:$0xff] %v270
    %287 = vst [vmem:[#allocation3 + $0x58] sm:$0xff] %v271
    %288 = vst [vmem:[#allocation3 + $0x60] sm:$0xff] %v272
    %289 = vst [vmem:[#allocation3 + $0x68] sm:$0xff] %v273
    %290 = vst [vmem:[#allocation3 + $0x70] sm:$0xff] %v274
    %291 = vst [vmem:[#allocation3 + $0x78] sm:$0xff] %v275
    // Predicated region
    $region22: #{tpu_custom_call.1} parent=1 // pred_check
      %p292 = pneg %p31
    $region23: #{tpu_custom_call.1} parent=1 // pred_check_branch
      %294 = sbr.rel (%p292) target = $region25
    $region24: #{tpu_custom_call.1} parent=1 // pred_region
      %v295 = vld [vmem:[#allocation2] sm:$0xff]
      %v296 = vld [vmem:[#allocation2 + $0x8] sm:$0xff]
      %v297 = vld [vmem:[#allocation2 + $0x10] sm:$0xff]
      %v298 = vld [vmem:[#allocation2 + $0x18] sm:$0xff]
      %v299 = vld [vmem:[#allocation2 + $0x20] sm:$0xff]
      %v300 = vld [vmem:[#allocation2 + $0x28] sm:$0xff]
      %v301 = vld [vmem:[#allocation2 + $0x30] sm:$0xff]
      %v302 = vld [vmem:[#allocation2 + $0x38] sm:$0xff]
      %v303 = vld [vmem:[#allocation2 + $0x40] sm:$0xff]
      %v304 = vld [vmem:[#allocation2 + $0x48] sm:$0xff]
      %v305 = vld [vmem:[#allocation2 + $0x50] sm:$0xff]
      %v306 = vld [vmem:[#allocation2 + $0x58] sm:$0xff]
      %v307 = vld [vmem:[#allocation2 + $0x60] sm:$0xff]
      %v308 = vld [vmem:[#allocation2 + $0x68] sm:$0xff]
      %v309 = vld [vmem:[#allocation2 + $0x70] sm:$0xff]
      %v310 = vld [vmem:[#allocation2 + $0x78] sm:$0xff]
      %311 = vadd.xlane.f32.xlu0 %v295
      %v312 = vpop.xlane.xlu0 %311
      %313 = vadd.xlane.f32.xlu0 %v296
      %v314 = vpop.xlane.xlu0 %313
      %315 = vadd.xlane.f32.xlu0 %v297
      %v316 = vpop.xlane.xlu0 %315
      %317 = vadd.xlane.f32.xlu0 %v298
      %v318 = vpop.xlane.xlu0 %317
      %319 = vadd.xlane.f32.xlu0 %v299
      %v320 = vpop.xlane.xlu0 %319
      %321 = vadd.xlane.f32.xlu0 %v300
      %v322 = vpop.xlane.xlu0 %321
      %323 = vadd.xlane.f32.xlu0 %v301
      %v324 = vpop.xlane.xlu0 %323
      %325 = vadd.xlane.f32.xlu0 %v302
      %v326 = vpop.xlane.xlu0 %325
      %327 = vadd.xlane.f32.xlu0 %v303
      %v328 = vpop.xlane.xlu0 %327
      %329 = vadd.xlane.f32.xlu0 %v304
      %v330 = vpop.xlane.xlu0 %329
      %331 = vadd.xlane.f32.xlu0 %v305
      %v332 = vpop.xlane.xlu0 %331
      %333 = vadd.xlane.f32.xlu0 %v306
      %v334 = vpop.xlane.xlu0 %333
      %335 = vadd.xlane.f32.xlu0 %v307
      %v336 = vpop.xlane.xlu0 %335
      %337 = vadd.xlane.f32.xlu0 %v308
      %v338 = vpop.xlane.xlu0 %337
      %339 = vadd.xlane.f32.xlu0 %v309
      %v340 = vpop.xlane.xlu0 %339
      %341 = vadd.xlane.f32.xlu0 %v310
      %v342 = vpop.xlane.xlu0 %341
      %v343 = vld [vmem:[#allocation3] sm:$0xff]
      %v344 = vld [vmem:[#allocation3 + $0x8] sm:$0xff]
      %v345 = vld [vmem:[#allocation3 + $0x10] sm:$0xff]
      %v346 = vld [vmem:[#allocation3 + $0x18] sm:$0xff]
      %v347 = vld [vmem:[#allocation3 + $0x20] sm:$0xff]
      %v348 = vld [vmem:[#allocation3 + $0x28] sm:$0xff]
      %v349 = vld [vmem:[#allocation3 + $0x30] sm:$0xff]
      %v350 = vld [vmem:[#allocation3 + $0x38] sm:$0xff]
      %v351 = vld [vmem:[#allocation3 + $0x40] sm:$0xff]
      %v352 = vld [vmem:[#allocation3 + $0x48] sm:$0xff]
      %v353 = vld [vmem:[#allocation3 + $0x50] sm:$0xff]
      %v354 = vld [vmem:[#allocation3 + $0x58] sm:$0xff]
      %v355 = vld [vmem:[#allocation3 + $0x60] sm:$0xff]
      %v356 = vld [vmem:[#allocation3 + $0x68] sm:$0xff]
      %v357 = vld [vmem:[#allocation3 + $0x70] sm:$0xff]
      %v358 = vld [vmem:[#allocation3 + $0x78] sm:$0xff]
      %359 = vmax.xlane.f32.xlu0 %v343
      %v360 = vpop.xlane.xlu0 %359
      %361 = vmax.xlane.f32.xlu0 %v344
      %v362 = vpop.xlane.xlu0 %361
      %363 = vmax.xlane.f32.xlu0 %v345
      %v364 = vpop.xlane.xlu0 %363
      %365 = vmax.xlane.f32.xlu0 %v346
      %v366 = vpop.xlane.xlu0 %365
      %367 = vmax.xlane.f32.xlu0 %v347
      %v368 = vpop.xlane.xlu0 %367
      %369 = vmax.xlane.f32.xlu0 %v348
      %v370 = vpop.xlane.xlu0 %369
      %371 = vmax.xlane.f32.xlu0 %v349
      %v372 = vpop.xlane.xlu0 %371
      %373 = vmax.xlane.f32.xlu0 %v350
      %v374 = vpop.xlane.xlu0 %373
      %375 = vmax.xlane.f32.xlu0 %v351
      %v376 = vpop.xlane.xlu0 %375
      %377 = vmax.xlane.f32.xlu0 %v352
      %v378 = vpop.xlane.xlu0 %377
      %379 = vmax.xlane.f32.xlu0 %v353
      %v380 = vpop.xlane.xlu0 %379
      %381 = vmax.xlane.f32.xlu0 %v354
      %v382 = vpop.xlane.xlu0 %381
      %383 = vmax.xlane.f32.xlu0 %v355
      %v384 = vpop.xlane.xlu0 %383
      %385 = vmax.xlane.f32.xlu0 %v356
      %v386 = vpop.xlane.xlu0 %385
      %387 = vmax.xlane.f32.xlu0 %v357
      %v388 = vpop.xlane.xlu0 %387
      %389 = vmax.xlane.f32.xlu0 %v358
      %v390 = vpop.xlane.xlu0 %389
      %v391 = vmul.f32 %v312, 0.00390625
      %v392 = vmul.f32 %v314, 0.00390625
      %v393 = vmul.f32 %v316, 0.00390625
      %v394 = vmul.f32 %v318, 0.00390625
      %v395 = vmul.f32 %v320, 0.00390625
      %v396 = vmul.f32 %v322, 0.00390625
      %v397 = vmul.f32 %v324, 0.00390625
      %v398 = vmul.f32 %v326, 0.00390625
      %v399 = vmul.f32 %v328, 0.00390625
      %v400 = vmul.f32 %v330, 0.00390625
      %v401 = vmul.f32 %v332, 0.00390625
      %v402 = vmul.f32 %v334, 0.00390625
      %v403 = vmul.f32 %v336, 0.00390625
      %v404 = vmul.f32 %v338, 0.00390625
      %v405 = vmul.f32 %v340, 0.00390625
      %v406 = vmul.f32 %v342, 0.00390625
      %v423 = vlaneseq
      %v424 = vand.u32 %v423, 127
      %v425 = vperm.slane %v391, %v424
      %v426 = vadd.s32 %v424, 4294967288
      %v427 = vperm.slane %v392, %v426
      %vm428 = vcmask 130112
      %v429 = vsel %vm428, %v427, %v425
      %v430 = vadd.s32 %v424, 4294967280
      %v431 = vperm.slane %v393, %v430
      %vm432 = vcmask 195712
      %v433 = vsel %vm432, %v431, %v429
      %v434 = vadd.s32 %v424, 4294967272
      %v435 = vperm.slane %v394, %v434
      %vm436 = vcmask 261312
      %v437 = vsel %vm436, %v435, %v433
      %v438 = vadd.s32 %v424, 4294967264
      %v439 = vperm.slane %v395, %v438
      %vm440 = vcmask 326912
      %v441 = vsel %vm440, %v439, %v437
      %v442 = vadd.s32 %v424, 4294967256
      %v443 = vperm.slane %v396, %v442
      %vm444 = vcmask 392512
      %v445 = vsel %vm444, %v443, %v441
      %v446 = vadd.s32 %v424, 4294967248
      %v447 = vperm.slane %v397, %v446
      %vm448 = vcmask 458112
      %v449 = vsel %vm448, %v447, %v445
      %v450 = vadd.s32 %v424, 4294967240
      %v451 = vperm.slane %v398, %v450
      %vm452 = vcmask 523712
      %v453 = vsel %vm452, %v451, %v449
      %v454 = vperm.slane %v399, %v424
      %v455 = vperm.slane %v400, %v426
      %v456 = vsel %vm428, %v455, %v454
      %v457 = vperm.slane %v401, %v430
      %v458 = vsel %vm432, %v457, %v456
      %v459 = vperm.slane %v402, %v434
      %v460 = vsel %vm436, %v459, %v458
      %v461 = vperm.slane %v403, %v438
      %v462 = vsel %vm440, %v461, %v460
      %v463 = vperm.slane %v404, %v442
      %v464 = vsel %vm444, %v463, %v462
      %v465 = vperm.slane %v405, %v446
      %v466 = vsel %vm448, %v465, %v464
      %v467 = vperm.slane %v406, %v450
      %v468 = vsel %vm452, %v467, %v466
      %vm469 = vcmask 1041409
      %v470 = vsel %vm469, %v468, %v453
      %vm472 = vcmask 517120
      %473 = vst.msk [vmem:[#allocation4] sm:$0x3] %vm472, %v470
      %v490 = vperm.slane %v360, %v424
      %v491 = vperm.slane %v362, %v426
      %v492 = vsel %vm428, %v491, %v490
      %v493 = vperm.slane %v364, %v430
      %v494 = vsel %vm432, %v493, %v492
      %v495 = vperm.slane %v366, %v434
      %v496 = vsel %vm436, %v495, %v494
      %v497 = vperm.slane %v368, %v438
      %v498 = vsel %vm440, %v497, %v496
      %v499 = vperm.slane %v370, %v442
      %v500 = vsel %vm444, %v499, %v498
      %v501 = vperm.slane %v372, %v446
      %v502 = vsel %vm448, %v501, %v500
      %v503 = vperm.slane %v374, %v450
      %v504 = vsel %vm452, %v503, %v502
      %v505 = vperm.slane %v376, %v424
      %v506 = vperm.slane %v378, %v426
      %v507 = vsel %vm428, %v506, %v505
      %v508 = vperm.slane %v380, %v430
      %v509 = vsel %vm432, %v508, %v507
      %v510 = vperm.slane %v382, %v434
      %v511 = vsel %vm436, %v510, %v509
      %v512 = vperm.slane %v384, %v438
      %v513 = vsel %vm440, %v512, %v511
      %v514 = vperm.slane %v386, %v442
      %v515 = vsel %vm444, %v514, %v513
      %v516 = vperm.slane %v388, %v446
      %v517 = vsel %vm448, %v516, %v515
      %v518 = vperm.slane %v390, %v450
      %v519 = vsel %vm452, %v518, %v517
      %v520 = vsel %vm469, %v519, %v504
      %522 = vst.msk [vmem:[#allocation4 + $0x2] sm:$0x3] %vm472, %v520
      %v523 = vld [vmem:[#allocation4] sm:$0xf]
      %v524 = vld [vmem:[%s1] sm:$0xff]
      %v525 = vld [vmem:[%s1 + $0x8] sm:$0xff]
      %v526 = vld [vmem:[%s1 + $0x10] sm:$0xff]
      %v527 = vld [vmem:[%s1 + $0x18] sm:$0xff]
      %v528 = vld [vmem:[%s1 + $0x20] sm:$0xff]
      %v529 = vld [vmem:[%s1 + $0x28] sm:$0xff]
      %v530 = vld [vmem:[%s1 + $0x30] sm:$0xff]
      %v531 = vld [vmem:[%s1 + $0x38] sm:$0xff]
      %vm532 = vcmask 523264
      %v534 = vsel %vm532, %v523, 0
      %536 = vmatpush.msra.mxu0 0.0
      %537 = vmatpush.msra.mxu0 0.0
      %538 = vmatpush.msra.mxu0 0.0
      %539 = vmatpush.msra.mxu0 0.0
      %540 = vmatpush.msra.mxu0 0.0
      %541 = vmatpush.msra.mxu0 0.0
      %542 = vmatpush.msra.mxu0 0.0
      %543 = vmatpush.msra.mxu0 0.0
      %544 = vmatpush.msra.mxu0 %v531
      %545 = vmatpush.msra.mxu0 %v530
      %546 = vmatpush.msra.mxu0 %v529
      %547 = vmatpush.msra.mxu0 %v528
      %548 = vmatpush.msra.mxu0 %v527
      %549 = vmatpush.msra.mxu0 %v526
      %550 = vmatpush.msra.mxu0 %v525
      %551 = vmatpush.msra.mxu0 %v524
      %552 = vmatmul.f32.gmra.mxu0 %v534
      %v553 = vpop.f32.mrf.mxu0
      %v554 = vadd.f32 0.0, %v553
      %555 = vdwg.mxu0
      %v556 = vmax.f32 %v554, 0.0
      %v557 = vld [vmem:[%s2] sm:$0xf]
      %vm558 = vcmask 31744
      %v560 = vsel %vm558, %v556, 0
      %vm562 = vcmask 1043456
      %v564 = vsel %vm562, %v557, 0
      %566 = vmatpush.msra.mxu0 0.0
      %567 = vmatpush.msra.mxu0 0.0
      %568 = vmatpush.msra.mxu0 0.0
      %569 = vmatpush.msra.mxu0 0.0
      %570 = vmatpush.msra.mxu0 0.0
      %571 = vmatpush.msra.mxu0 0.0
      %572 = vmatpush.msra.mxu0 0.0
      %573 = vmatpush.msra.mxu0 0.0
      %574 = vmatpush.msra.mxu0 0.0
      %575 = vmatpush.msra.mxu0 0.0
      %576 = vmatpush.msra.mxu0 0.0
      %577 = vmatpush.msra.mxu0 0.0
      %578 = vmatpush.msra.mxu0 0.0
      %579 = vmatpush.msra.mxu0 0.0
      %580 = vmatpush.msra.mxu0 0.0
      %581 = vmatpush.msra.mxu0 %v564
      %582 = vmatmul.f32.gmra.mxu0 %v560
      %v583 = vpop.f32.mrf.mxu0
      %v584 = vadd.f32 0.0, %v583
      %585 = vdwg.mxu0
      %v587 = vrot.slane %v584, 2
      %v589 = vadd.f32 %v584, %v587
      %v590 = vxor.u32 %v589, 2147483648
      %v591 = vmul.f32 %v590, 1.442695
      %v592 = vpow.pop %v591
      %v593 = vadd.f32 %v592, 1.0
      %v594 = vrcp.pop %v593
      %v595 = vmul.f32 %v593, %v594
      %v596 = vsub.f32 1.0, %v595
      %v597 = vmul.f32 %v594, %v596
      %v598 = vadd.f32 %v594, %v597
      %vm599 = vweird.f32 %v593
      %vm600 = vweird.f32 %v594
      %vm601 = vmor %vm599, %vm600
      %v602 = vsel %vm601, %v594, %v598
      %v603 = vand.u32 2147483647, %v593
      %vm604 = vcmp.eq.f32.partialorder %v603, 8.507059e+37
      %v605 = vand.u32 %v593, 2147483648
      %v606 = vor.u32 1.1754944e-38, %v605
      %v607 = vsel %vm604, %v606, %v602
      %v608 = vmul.f32 1.0, %v607
      %609 = vst.msk [vmem:[#allocation8] sm:$0x3] %vm472, %v608
    $region25: #{tpu_custom_call.1} parent=1 // pred_fallthru
      _
    // Predicated region
    $region26: #{tpu_custom_call.1} parent=1 // pred_check
      _
    $region27: #{tpu_custom_call.1} parent=1 // pred_check_branch
      %611 = sbr.rel (0) target = $region29
    $region28: #{tpu_custom_call.1} parent=1 // pred_region
      %613 = vsyncadd [#allocation7], 0
      %s615 = sshll.u32 [#allocation8], 4
      %s616 = int_to_ptr.vmem [resolvable:$true] %s615
      %s617 = sshll.u32 %s3, 4
      %s618 = int_to_ptr.hbm [resolvable:$true] %s617
      %620 = dma.vmem_to_hbm [thread:$0]  %s616, 32, %s618, [#allocation7]
    $region29: #{tpu_custom_call.1} parent=1 // pred_fallthru
      _
    // Predicated region
    $region30: #{tpu_custom_call.1} parent=1 // pred_check
      _
    $region31: #{tpu_custom_call.1} parent=1 // pred_check_branch
      %622 = sbr.rel (0) target = $region33
    $region32: #{tpu_custom_call.1} parent=1 // pred_region
      %624 = dma.done [#allocation7], 32
    $region33: #{tpu_custom_call.1} parent=1 // pred_fallthru
      _
    %625 = vsyncpa [#allocation6], 1
    %626 = vsyncpa [#allocation7], 1

</llo_original>
